<compile_context>
chip_gen: v7x
topology: tpu7x:2x2x1
jax: 0.10.0
libtpu: 0.0.40
codegen_flags: <defaults>
</compile_context>

<pallas_src>
import math

import jax
import jax.numpy as jnp
from jax.experimental import pallas as pl
from jax.experimental.pallas import tpu as pltpu


def _round_up(x, m):
    return (x + m - 1) // m * m


def _cat_conv_kernel(x_ref, w_ref, b_ref, o_ref):
    """x_ref: (1, L_pad, C_in)  whole (padded) sequence of one batch, resident
       w_ref: (K, C_in, C_out)  resident weights
       b_ref: (1, C_out)        resident bias
       o_ref: (1, TM, C_out)    one row tile of the output."""
    tm = o_ref.shape[1]
    c_out = o_ref.shape[2]
    K = w_ref.shape[0]

    t = pl.program_id(1)
    off = pl.multiple_of(t * tm, 8)

    # Fold the bias add into the accumulator init (single broadcast, no per-k VPU work).
    acc = jnp.broadcast_to(b_ref[...], (tm, c_out)).astype(jnp.float32)
    for k in range(K):  # static unroll: 3 MXU matmuls, f32 accumulation
        xk = x_ref[0, pl.ds(off + k, tm), :]            # (TM, C_in) shifted window
        acc = acc + jnp.dot(xk, w_ref[k], preferred_element_type=jnp.float32)
    o_ref[0] = acc.astype(o_ref.dtype)


def cat_conv_pallas(x, weight, bias, *, tile_m=256):
    """x: (B, L, C_in); weight: (C_out, C_in, K) (PyTorch Conv1d layout); bias: (C_out,).
    Returns (B, C_out, L_out), L_out = L - K + 1 — identical to Cat_conv.forward."""
    B, L, C_in = x.shape
    C_out, _, K = weight.shape
    L_out = L - (K - 1)
    assert L_out >= 1, "sequence too short for kernel_size=3 valid conv"

    # Row tile: multiple of 8 sublanes; big enough to pipeline, small enough for VMEM.
    TM = min(tile_m, _round_up(L_out, 8))
    L_out_pad = _round_up(L_out, TM)
    L_pad = _round_up(L_out_pad + (K - 1), 8)
    if L_pad > L:
        x = jnp.pad(x, ((0, 0), (0, L_pad - L), (0, 0)))

    # (C_out, C_in, K) -> (K, C_in, C_out): each W_k contracts over C_in on the MXU,
    # and the kernel output last dim (C_out) sits on the 128-lane axis (lane-dense stores).
    w_kio = jnp.transpose(weight, (2, 1, 0)).astype(x.dtype)
    b2d = bias.reshape(1, C_out).astype(x.dtype)

    n_t = L_out_pad // TM
    itemsize = jnp.dtype(x.dtype).itemsize

    # Scoped-VMEM request: per-batch x slab (double-buffered) + resident weights/bias
    # + output tiles.  Clamped at 48 MiB so the same plan fits v7x's 64 MiB physical VMEM.
    vmem_need = (2 * L_pad * C_in * itemsize
                 + 2 * K * C_in * C_out * itemsize
                 + 4 * TM * C_out * itemsize
                 + TM * C_out * 4)
    vmem_limit = int(min(max(32 << 20, 2 * vmem_need), 48 << 20))

    cost = pl.CostEstimate(
        flops=2 * B * L_out_pad * K * C_in * C_out,
        transcendentals=0,
        bytes_accessed=(x.size + w_kio.size + b2d.size) * itemsize
                       + B * L_out_pad * C_out * itemsize)

    out = pl.pallas_call(
        _cat_conv_kernel,
        out_shape=jax.ShapeDtypeStruct((B, L_out_pad, C_out), x.dtype),
        grid_spec=pltpu.PrefetchScalarGridSpec(
            num_scalar_prefetch=0,
            grid=(B, n_t),
            in_specs=[
                # Whole padded sequence of one batch stays resident across its row tiles
                # (block index constant in t => no re-DMA per tile).
                pl.BlockSpec((1, L_pad, C_in), lambda b, t: (b, 0, 0)),
                pl.BlockSpec((K, C_in, C_out), lambda b, t: (0, 0, 0)),
                pl.BlockSpec((1, C_out), lambda b, t: (0, 0)),
            ],
            out_specs=pl.BlockSpec((1, TM, C_out), lambda b, t: (b, t, 0)),
        ),
        compiler_params=pltpu.CompilerParams(
            dimension_semantics=("parallel", "parallel"),
            vmem_limit_bytes=vmem_limit),
        cost_estimate=cost,
    )(x, w_kio, b2d)

    # Crop the row padding and match PyTorch Conv1d output layout (B, C_out, L_out).
    return jnp.transpose(out[:, :L_out, :], (0, 2, 1))


def _reference(x, weight, bias):
    """Independent XLA reference: permute + valid Conv1d, PyTorch semantics."""
    xp = jnp.transpose(x, (0, 2, 1))                      # (B, C_in, L)
    out = jax.lax.conv_general_dilated(
        xp, weight, window_strides=(1,), padding="VALID",
        dimension_numbers=("NCH", "OIH", "NCH"))          # (B, C_out, L_out)
    return out + bias[None, :, None]


if __name__ == "__main__":
    key = jax.random.PRNGKey(0)

    # Small shapes consistent with the module: Cat_conv(in_dim=32, out_dim=16)
    # => Conv1d(32, 32//4*16 = 128, kernel_size=3); input x: (B, L, in_dim).
    B, L, in_dim, out_dim = 2, 16, 32, 16
    C_in = in_dim
    C_out = int(in_dim / 4 * out_dim)   # 128 -> lane-dense output
    K = 3

    k_x, k_w, k_b = jax.random.split(key, 3)
    x = jax.random.normal(k_x, (B, L, C_in), dtype=jnp.float32)
    bound = 1.0 / math.sqrt(C_in * K)   # PyTorch Conv1d init bound
    weight = jax.random.uniform(k_w, (C_out, C_in, K), jnp.float32, -bound, bound)
    bias = jax.random.uniform(k_b, (C_out,), jnp.float32, -bound, bound)

    out = cat_conv_pallas(x, weight, bias)
    jax.block_until_ready(out)

    ref = _reference(x, weight, bias)
    assert out.shape == (B, C_out, L - K + 1), out.shape
    assert jnp.allclose(out, ref, atol=1e-4, rtol=1e-4), float(
        jnp.max(jnp.abs(out - ref)))

    print("KERNEL_OK")
</pallas_src>

<mosaic_0001>
module attributes {stable_mosaic.version = 11 : i64} {
  func.func @_cat_conv_kernel(%arg0: i32, %arg1: i32, %arg2: memref<1x24x32xf32, #tpu.memory_space<vmem>>, %arg3: memref<3x32x128xf32, #tpu.memory_space<vmem>>, %arg4: memref<1x128xf32, #tpu.memory_space<vmem>>, %arg5: memref<1x16x128xf32, #tpu.memory_space<vmem>>) attributes {dimension_semantics = [#tpu.dimension_semantics<parallel>, #tpu.dimension_semantics<parallel>], iteration_bounds = array<i64: 2, 1>, scalar_prefetch = 0 : i64, scratch_operands = 0 : i64, tpu.core_type = #tpu.core_type<tc>, window_params = [{transform_indices = @transform_0, window_bounds = array<i64: 1, 24, 32>}, {pipeline_mode = #tpu.pipeline_mode<synchronous>, transform_indices = @transform_1, window_bounds = array<i64: 3, 32, 128>}, {pipeline_mode = #tpu.pipeline_mode<synchronous>, transform_indices = @transform_2, window_bounds = array<i64: 1, 128>}, {transform_indices = @transform_3, window_bounds = array<i64: 1, 16, 128>}]} {
    %c16_i32 = arith.constant 16 : i32
    %0 = arith.muli %arg1, %c16_i32 : i32
    %1 = tpu.assume_multiple %0, 8 : i32
    %c0 = arith.constant 0 : index
    %c0_0 = arith.constant 0 : index
    %2 = vector.load %arg4[%c0, %c0_0] : memref<1x128xf32, #tpu.memory_space<vmem>>, vector<1x128xf32>
    %3 = vector.shape_cast %2 : vector<1x128xf32> to vector<1x128xf32>
    %4 = vector.broadcast %3 : vector<1x128xf32> to vector<16x128xf32>
    %c0_i32 = arith.constant 0 : i32
    %5 = arith.addi %1, %c0_i32 : i32
    %c0_1 = arith.constant 0 : index
    %6 = arith.index_cast %5 : i32 to index
    %c0_2 = arith.constant 0 : index
    %7 = vector.load %arg2[%c0_1, %6, %c0_2] : memref<1x24x32xf32, #tpu.memory_space<vmem>>, vector<1x16x32xf32>
    %8 = vector.shape_cast %7 : vector<1x16x32xf32> to vector<16x32xf32>
    %c0_3 = arith.constant 0 : index
    %c0_4 = arith.constant 0 : index
    %c0_5 = arith.constant 0 : index
    %9 = vector.load %arg3[%c0_3, %c0_4, %c0_5] : memref<3x32x128xf32, #tpu.memory_space<vmem>>, vector<1x32x128xf32>
    %10 = vector.shape_cast %9 : vector<1x32x128xf32> to vector<32x128xf32>
    %cst = arith.constant dense<0.000000e+00> : vector<16x128xf32>
    %11 = tpu.matmul %8, %10, %cst {dimension_numbers = #tpu.dot_dimension_numbers<[1], [0], [0], [1], [0, 0, 1, 1], [], []>} : vector<16x32xf32>, vector<32x128xf32>, vector<16x128xf32> -> vector<16x128xf32>
    %12 = arith.addf %4, %11 : vector<16x128xf32>
    %c1_i32 = arith.constant 1 : i32
    %13 = arith.addi %1, %c1_i32 : i32
    %c0_6 = arith.constant 0 : index
    %14 = arith.index_cast %13 : i32 to index
    %c0_7 = arith.constant 0 : index
    %15 = vector.load %arg2[%c0_6, %14, %c0_7] : memref<1x24x32xf32, #tpu.memory_space<vmem>>, vector<1x16x32xf32>
    %16 = vector.shape_cast %15 : vector<1x16x32xf32> to vector<16x32xf32>
    %c1 = arith.constant 1 : index
    %c0_8 = arith.constant 0 : index
    %c0_9 = arith.constant 0 : index
    %17 = vector.load %arg3[%c1, %c0_8, %c0_9] : memref<3x32x128xf32, #tpu.memory_space<vmem>>, vector<1x32x128xf32>
    %18 = vector.shape_cast %17 : vector<1x32x128xf32> to vector<32x128xf32>
    %cst_10 = arith.constant dense<0.000000e+00> : vector<16x128xf32>
    %19 = tpu.matmul %16, %18, %cst_10 {dimension_numbers = #tpu.dot_dimension_numbers<[1], [0], [0], [1], [0, 0, 1, 1], [], []>} : vector<16x32xf32>, vector<32x128xf32>, vector<16x128xf32> -> vector<16x128xf32>
    %20 = arith.addf %12, %19 : vector<16x128xf32>
    %c2_i32 = arith.constant 2 : i32
    %21 = arith.addi %1, %c2_i32 : i32
    %c0_11 = arith.constant 0 : index
    %22 = arith.index_cast %21 : i32 to index
    %c0_12 = arith.constant 0 : index
    %23 = vector.load %arg2[%c0_11, %22, %c0_12] : memref<1x24x32xf32, #tpu.memory_space<vmem>>, vector<1x16x32xf32>
    %24 = vector.shape_cast %23 : vector<1x16x32xf32> to vector<16x32xf32>
    %c2 = arith.constant 2 : index
    %c0_13 = arith.constant 0 : index
    %c0_14 = arith.constant 0 : index
    %25 = vector.load %arg3[%c2, %c0_13, %c0_14] : memref<3x32x128xf32, #tpu.memory_space<vmem>>, vector<1x32x128xf32>
    %26 = vector.shape_cast %25 : vector<1x32x128xf32> to vector<32x128xf32>
    %cst_15 = arith.constant dense<0.000000e+00> : vector<16x128xf32>
    %27 = tpu.matmul %24, %26, %cst_15 {dimension_numbers = #tpu.dot_dimension_numbers<[1], [0], [0], [1], [0, 0, 1, 1], [], []>} : vector<16x32xf32>, vector<32x128xf32>, vector<16x128xf32> -> vector<16x128xf32>
    %28 = arith.addf %20, %27 : vector<16x128xf32>
    %c0_16 = arith.constant 0 : index
    %c0_17 = arith.constant 0 : index
    %c0_18 = arith.constant 0 : index
    %29 = vector.load %arg5[%c0_16, %c0_17, %c0_18] : memref<1x16x128xf32, #tpu.memory_space<vmem>>, vector<1x16x128xf32>
    %30 = vector.shape_cast %29 : vector<1x16x128xf32> to vector<16x128xf32>
    %31 = vector.shape_cast %28 : vector<16x128xf32> to vector<1x16x128xf32>
    tpu.vector_store %arg5[%c0_16, %c0_17, %c0_18], %31 {strides = array<i32>} : memref<1x16x128xf32, #tpu.memory_space<vmem>>, vector<1x16x128xf32>,
    return
  }
  func.func @transform_0(%arg0: i32, %arg1: i32) -> (i32, i32, i32) {
    %c0_i32 = arith.constant 0 : i32
    %c0_i32_0 = arith.constant 0 : i32
    %c0_i32_1 = arith.constant 0 : i32
    return %arg0, %c0_i32, %c0_i32_0 : i32, i32, i32
  }
  func.func @transform_1(%arg0: i32, %arg1: i32) -> (i32, i32, i32) {
    %c0_i32 = arith.constant 0 : i32
    %c0_i32_0 = arith.constant 0 : i32
    %c0_i32_1 = arith.constant 0 : i32
    %c0_i32_2 = arith.constant 0 : i32
    return %c0_i32, %c0_i32_0, %c0_i32_1 : i32, i32, i32
  }
  func.func @transform_2(%arg0: i32, %arg1: i32) -> (i32, i32) {
    %c0_i32 = arith.constant 0 : i32
    %c0_i32_0 = arith.constant 0 : i32
    %c0_i32_1 = arith.constant 0 : i32
    return %c0_i32, %c0_i32_0 : i32, i32
  }
  func.func @transform_3(%arg0: i32, %arg1: i32) -> (i32, i32, i32) {
    %c0_i32 = arith.constant 0 : i32
    %c0_i32_0 = arith.constant 0 : i32
    return %arg0, %arg1, %c0_i32 : i32, i32, i32
  }
}

</mosaic_0001>

<llo_original>
// kernel: tpu_custom_call.1
$region0: #{tpu_custom_call.1}
  #allocation0 [shape = 'u32[]', space=smem, size = 0x4, offset = 0x4, fixed_abs, tag = 'smem constant byte address 0x4 - core index']
  #allocation1 [shape = 'u32[144,128]{1,0:T(1,128)}', space=vmem, size = 0x12000, scoped, tag = 'internal scratch']
  %s0 = inlined_call_operand.hbm [shape: f32[2,24,32], index: 0, kind: input, shape index: {}]
  %s1 = inlined_call_operand.hbm [shape: f32[3,32,128], index: 1, kind: input, shape index: {}]
  %s2 = inlined_call_operand.vmem [shape: f32[1,128], index: 2, kind: input, shape index: {}]
  %s3 = inlined_call_operand.hbm [shape: f32[2,16,128], index: 3, kind: output, shape index: {}]
  %s4 = sld [smem:[#allocation0]]
  $region53: #{tpu_custom_call.1} parent=0
    _
  %s6 = ssub.s32 1, %s4
  %s7 = scalar_select 0, %s6, %s4
  $region1: #{tpu_custom_call.1} parent=0
    #allocation2 [shape = 'u8[24576]{0}', space=vmem, size = 0x6000, scoped, tag = 'input window, operand 0']
    #allocation3 [shape = 's32[2]{0}', space=sflag, size = 0x8, scoped, tag = 'scoped memory for tpu_custom_call.1']
    #allocation4 [shape = 's32[2]{0}', space=sflag, size = 0x8, scoped, tag = 'scoped memory for tpu_custom_call.1']
    #allocation5 [shape = 'u8[49152]{0}', space=vmem, size = 0xc000, scoped, tag = 'input window, operand 1, single buffered']
    #allocation6 [shape = 's32[1]{0}', space=sflag, size = 0x4, scoped, tag = 'scoped memory for tpu_custom_call.1']
    #allocation7 [shape = 'u8[16384]{0}', space=vmem, size = 0x4000, scoped, tag = 'output window, operand 0']
    %8 = vsyncpa [#allocation3], 0
    %s9 = scalar_lea.sflag [#allocation3], 1
    %10 = vsyncpa %s9, 0
    %11 = vsyncpa [#allocation6], 0
    %12 = vsyncpa [#allocation4], 0
    %s13 = scalar_lea.sflag [#allocation4], 1
    %14 = vsyncpa %s13, 0
    loop: start=0, step=1, limit=4
    $region2: #{tpu_custom_call.1} parent=1 // loop_pre_header
      _
    $region3: #{tpu_custom_call.1} parent=1 // loop_header
      %s16 = sphi 0, %s20
      %p17 = scmp.ge.s32.totalorder %s16, 4
      %s23 = sphi 0, %s35
      %s24 = sphi 0, %s31
      %s25 = sphi 0, %s23
      %s26 = sphi 0, %s24
      %s27 = sphi 0, %s25
      %s28 = sphi 0, %s26
      %s38 = sphi 0, %s40
      %s41 = sphi 0, %s38
      %s42 = sphi 0, %s41
      %s58 = sphi 0, %s42
      %s62 = sphi 0, %s62
      %s64 = sphi 0, %s62
      %s65 = sphi 0, %s64
      %s79 = sphi 0, %s65
      %s83 = sphi 0, %s83
      %s85 = sphi 0, %s83
      %s86 = sphi 0, %s85
      %s100 = sphi 0, %s86
      %s108 = sphi 0, %s110
      %s111 = sphi 0, %s108
      %s112 = sphi 0, %s111
      %s128 = sphi 0, %s112
    $region4: #{tpu_custom_call.1} parent=1 // loop_header_branch
      %19 = sbr.rel (%p17) target = $region8
    $region5: #{tpu_custom_call.1} parent=1 // loop_body
      %s21 = ssub.s32 %s16, 1
      %s22 = ssub.s32 %s16, 2
      %s29 = sadd.s32 1, %s24
      %p30 = scmp.ge.s32.totalorder %s29, 1
      %s31 = scalar_select %p30, 0, %s29
      %s32 = sadd.s32 1, %s23
      %s33 = scalar_select %p30, %s32, %s23
      %p34 = scmp.ge.s32.totalorder %s33, 2
      %s35 = scalar_select %p34, 0, %s33
      %s36 = ssub.s32 %s23, %s35
      %p37 = scmp.eq.s32.totalorder %s36, 0
      %s39 = sadd.s32 %s38, 1
      %s40 = scalar_select %p37, %s38, %s39
      %p43 = pneg %p37
      %p44 = scmp.eq.s32.totalorder %s16, 1
      %p45 = por %p43, %p44
      %p46 = scmp.ne.s32.totalorder %s38, %s41
      %p47 = scmp.eq.s32.totalorder %s16, 0
      %p48 = por %p46, %p47
      %p49 = scmp.ne.s32.totalorder %s38, %s41
      %p50 = scmp.eq.s32.totalorder %s21, 1
      %p51 = por %p49, %p50
      %p52 = scmp.ne.s32.totalorder %s41, %s42
      %p53 = scmp.eq.s32.totalorder %s21, 0
      %p54 = por %p52, %p53
      %p55 = scmp.ne.s32.totalorder %s41, %s42
      %p56 = scmp.eq.s32.totalorder %s22, 1
      %p57 = por %p55, %p56
      %p59 = scmp.ne.s32.totalorder %s42, %s58
      %p60 = scmp.eq.s32.totalorder %s22, 0
      %p61 = por %p59, %p60
      %s63 = sadd.s32 %s62, 1
      %p66 = scmp.eq.s32.totalorder %s16, 1
      %p67 = scmp.ne.s32.totalorder %s62, %s64
      %p68 = scmp.eq.s32.totalorder %s16, 0
      %p69 = por %p67, %p68
      %p70 = scmp.ne.s32.totalorder %s62, %s64
      %p71 = scmp.eq.s32.totalorder %s21, 1
      %p72 = por %p70, %p71
      %p73 = scmp.ne.s32.totalorder %s64, %s65
      %p74 = scmp.eq.s32.totalorder %s21, 0
      %p75 = por %p73, %p74
      %p76 = scmp.ne.s32.totalorder %s64, %s65
      %p77 = scmp.eq.s32.totalorder %s22, 1
      %p78 = por %p76, %p77
      %p80 = scmp.ne.s32.totalorder %s65, %s79
      %p81 = scmp.eq.s32.totalorder %s22, 0
      %p82 = por %p80, %p81
      %s84 = sadd.s32 %s83, 1
      %p87 = scmp.eq.s32.totalorder %s16, 1
      %p88 = scmp.ne.s32.totalorder %s83, %s85
      %p89 = scmp.eq.s32.totalorder %s16, 0
      %p90 = por %p88, %p89
      %p91 = scmp.ne.s32.totalorder %s83, %s85
      %p92 = scmp.eq.s32.totalorder %s21, 1
      %p93 = por %p91, %p92
      %p94 = scmp.ne.s32.totalorder %s85, %s86
      %p95 = scmp.eq.s32.totalorder %s21, 0
      %p96 = por %p94, %p95
      %p97 = scmp.ne.s32.totalorder %s85, %s86
      %p98 = scmp.eq.s32.totalorder %s22, 1
      %p99 = por %p97, %p98
      %p101 = scmp.ne.s32.totalorder %s86, %s100
      %p102 = scmp.eq.s32.totalorder %s22, 0
      %p103 = por %p101, %p102
      %s104 = ssub.s32 %s23, %s35
      %s105 = ssub.s32 %s24, %s31
      %s106 = sor.u32 %s104, %s105
      %p107 = scmp.eq.s32.totalorder %s106, 0
      %s109 = sadd.s32 %s108, 1
      %s110 = scalar_select %p107, %s108, %s109
      %p113 = pneg %p107
      %p114 = scmp.eq.s32.totalorder %s16, 1
      %p115 = por %p113, %p114
      %p116 = scmp.ne.s32.totalorder %s108, %s111
      %p117 = scmp.eq.s32.totalorder %s16, 0
      %p118 = por %p116, %p117
      %p119 = scmp.ne.s32.totalorder %s108, %s111
      %p120 = scmp.eq.s32.totalorder %s21, 1
      %p121 = por %p119, %p120
      %p122 = scmp.ne.s32.totalorder %s111, %s112
      %p123 = scmp.eq.s32.totalorder %s21, 0
      %p124 = por %p122, %p123
      %p125 = scmp.ne.s32.totalorder %s111, %s112
      %p126 = scmp.eq.s32.totalorder %s22, 1
      %p127 = por %p125, %p126
      %p129 = scmp.ne.s32.totalorder %s112, %s128
      %p130 = scmp.eq.s32.totalorder %s22, 0
      %p131 = por %p129, %p130
      %p132 = scmp.le.s32.totalorder 1, %s16
      %p133 = scmp.lt.s32.totalorder %s16, 3
      %p134 = pnand %p132, %p133
      %p135 = pneg %p134
      // Predicated region
      $region9: #{tpu_custom_call.1} parent=5 // pred_check
        _
      $region10: #{tpu_custom_call.1} parent=5 // pred_check_branch
        %137 = sbr.rel (%p134) target = $region12
      $region11: #{tpu_custom_call.1} parent=5 // pred_region
        %s138 = ssub.s32 %s16, 1
        // Predicated region
        $region13: #{tpu_custom_call.1} parent=11 // pred_check
          %p139 = pneg %p75
        $region14: #{tpu_custom_call.1} parent=11 // pred_check_branch
          %141 = sbr.rel (%p139) target = $region16
        $region15: #{tpu_custom_call.1} parent=11 // pred_region
          %s143 = ssub.s32 1536, 1536
          %144 = vsyncadd [#allocation6], %s143
          %s145 = sshll.u32 [#allocation5], 4
          %s146 = int_to_ptr.vmem [resolvable:$true] %s145
          %151 = dma.hbm_to_vmem [thread:$0]  %s1, 1536, %s146, [#allocation6], 128, 128, 8
        $region16: #{tpu_custom_call.1} parent=11 // pred_fallthru
          _
        // Predicated region
        $region17: #{tpu_custom_call.1} parent=11 // pred_check
          %p152 = pneg %p96
        $region18: #{tpu_custom_call.1} parent=11 // pred_check_branch
          %154 = sbr.rel (%p152) target = $region20
        $region19: #{tpu_custom_call.1} parent=11 // pred_region
          _
        $region20: #{tpu_custom_call.1} parent=11 // pred_fallthru
          _
      $region12: #{tpu_custom_call.1} parent=5 // pred_fallthru
        _
      %p155 = scmp.lt.s32.totalorder %s16, 2
      // Predicated region
      $region21: #{tpu_custom_call.1} parent=5 // pred_check
        %p156 = pneg %p155
      $region22: #{tpu_custom_call.1} parent=5 // pred_check_branch
        %158 = sbr.rel (%p156) target = $region24
      $region23: #{tpu_custom_call.1} parent=5 // pred_region
        // Predicated region
        $region25: #{tpu_custom_call.1} parent=23 // pred_check
          %p159 = pneg %p48
        $region26: #{tpu_custom_call.1} parent=23 // pred_check_branch
          %161 = sbr.rel (%p159) target = $region28
        $region27: #{tpu_custom_call.1} parent=23 // pred_region
          %s162 = sand.u32 %s38, 1
          %s163 = scalar_lea.sflag [#allocation3], %s162
          %s164 = sand.u32 %s38, 1
          %s165 = smul.addr %s164, 24
          %s166 = scalar_lea.vmem [#allocation2], %s165
          %s168 = ssub.s32 384, 384
          %169 = vsyncadd %s163, %s168
          %s170 = smul.addr %s23, 3
          %s171 = smul.addr %s170, 128
          %s172 = scalar_lea.hbm %s0, %s171
          %s173 = sshll.u32 %s166, 4
          %s174 = int_to_ptr.vmem [resolvable:$true] %s173
          %179 = dma.hbm_to_vmem [thread:$0]  %s172, 384, %s174, %s163, 128, 128, 8
        $region28: #{tpu_custom_call.1} parent=23 // pred_fallthru
          _
      $region24: #{tpu_custom_call.1} parent=5 // pred_fallthru
        _
      %p180 = scmp.le.s32.totalorder 1, %s16
      %p181 = scmp.lt.s32.totalorder %s16, 3
      %p182 = pnand %p180, %p181
      %p183 = pneg %p182
      // Predicated region
      $region29: #{tpu_custom_call.1} parent=5 // pred_check
        _
      $region30: #{tpu_custom_call.1} parent=5 // pred_check_branch
        %185 = sbr.rel (%p182) target = $region32
      $region31: #{tpu_custom_call.1} parent=5 // pred_region
        %s186 = ssub.s32 %s16, 1
        %s187 = sand.u32 %s41, 1
        %s188 = scalar_lea.sflag [#allocation3], %s187
        %s189 = sand.u32 %s41, 1
        %s190 = smul.addr %s189, 24
        %s191 = scalar_lea.vmem [#allocation2], %s190
        // Predicated region
        $region33: #{tpu_custom_call.1} parent=31 // pred_check
          %p192 = pneg %p54
        $region34: #{tpu_custom_call.1} parent=31 // pred_check_branch
          %194 = sbr.rel (%p192) target = $region36
        $region35: #{tpu_custom_call.1} parent=31 // pred_region
          %195 = dma.done %s188, 384
        $region36: #{tpu_custom_call.1} parent=31 // pred_fallthru
          _
        // Predicated region
        $region37: #{tpu_custom_call.1} parent=31 // pred_check
          %p196 = pneg %p75
        $region38: #{tpu_custom_call.1} parent=31 // pred_check_branch
          %198 = sbr.rel (%p196) target = $region40
        $region39: #{tpu_custom_call.1} parent=31 // pred_region
          %199 = dma.done [#allocation6], 1536
        $region40: #{tpu_custom_call.1} parent=31 // pred_fallthru
          _
        %s200 = sand.u32 %s41, 1
        %s201 = scalar_lea.sflag [#allocation3], %s200
        %s202 = sand.u32 %s41, 1
        %s203 = smul.addr %s202, 24
        %s204 = scalar_lea.vmem [#allocation2], %s203
        %p205 = pneg %p54
        %p206 = pneg %p51
        %p207 = pneg %p75
        %p208 = pneg %p72
        %p209 = pneg %p96
        %p210 = pneg %p93
        %p211 = pneg %p124
        %p212 = pneg %p121
        %s213 = sand.u32 %s111, 1
        %s214 = scalar_lea.sflag [#allocation4], %s213
        %s215 = sand.u32 %s111, 1
        %s216 = smul.addr %s215, 16
        %s217 = scalar_lea.vmem [#allocation7], %s216
        %s218 = smul.u32 2, %s26
        %s219 = smul.u32 %s26, 16
        %v220 = vld [vmem:[%s2] sm:$0x1]
        %v222 = vlaneseq
        %v223 = vshrl.u32 %v222, 7
        %v224 = vsub.s32 0, %v223
        %v225 = vrot.slane %v220, %v224
        %s227 = scalar_lea.vmem %s191, %s219 [#allocation2]
        %v228 = vld [vmem:[%s227] sm:$0xff]
        %v229 = vld [vmem:[%s227 + $0x8] sm:$0xff]
        %v230 = vld [vmem:[#allocation5] sm:$0xff]
        %v231 = vld [vmem:[#allocation5 + $0x8] sm:$0xff]
        %v232 = vld [vmem:[#allocation5 + $0x10] sm:$0xff]
        %v233 = vld [vmem:[#allocation5 + $0x18] sm:$0xff]
        %vm234 = vcmask 261120
        %v236 = vsel %vm234, %v228, 0
        %v239 = vsel %vm234, %v229, 0
        %241 = vmatprep.subr.mxu0 0.0
        %242 = vmatpush1.msra.mxu0 %v230
        %243 = vmatprep.subr.mxu0 0.0
        %244 = vmatpush1.msra.mxu0 %v231
        %245 = vmatprep.subr.mxu0 0.0
        %246 = vmatpush1.msra.mxu0 %v232
        %247 = vmatprep.subr.mxu0 0.0
        %248 = vmatpush1.msra.mxu0 %v233
        %249 = vmatprep.subr.mxu0 0.0
        %250 = vmatpush1.msra.mxu0 0.0
        %251 = vmatprep.subr.mxu0 0.0
        %252 = vmatpush1.msra.mxu0 0.0
        %253 = vmatprep.subr.mxu0 0.0
        %254 = vmatpush1.msra.mxu0 0.0
        %255 = vmatprep.subr.mxu0 0.0
        %256 = vmatpush1.msra.mxu0 0.0
        %257 = vmatprep.subr.mxu0 0.0
        %258 = vmatpush1.msra.mxu0 0.0
        %259 = vmatprep.subr.mxu0 0.0
        %260 = vmatpush1.msra.mxu0 0.0
        %261 = vmatprep.subr.mxu0 0.0
        %262 = vmatpush1.msra.mxu0 0.0
        %263 = vmatprep.subr.mxu0 0.0
        %264 = vmatpush1.msra.mxu0 0.0
        %265 = vmatprep.subr.mxu0 0.0
        %266 = vmatpush1.msra.mxu0 0.0
        %267 = vmatprep.subr.mxu0 0.0
        %268 = vmatpush1.msra.mxu0 0.0
        %269 = vmatprep.subr.mxu0 0.0
        %270 = vmatpush1.msra.mxu0 0.0
        %271 = vmatprep.subr.mxu0 0.0
        %272 = vmatpush1.msra.mxu0 0.0
        %273 = vmatprep.subr.mxu0 0.0
        %274 = vmatpush1.msra.mxu0 0.0
        %275 = vmatprep.subr.mxu0 0.0
        %276 = vmatpush1.msra.mxu0 0.0
        %277 = vmatprep.subr.mxu0 0.0
        %278 = vmatpush1.msra.mxu0 0.0
        %279 = vmatprep.subr.mxu0 0.0
        %280 = vmatpush1.msra.mxu0 0.0
        %281 = vmatprep.subr.mxu0 0.0
        %282 = vmatpush1.msra.mxu0 0.0
        %283 = vmatprep.subr.mxu0 0.0
        %284 = vmatpush1.msra.mxu0 0.0
        %285 = vmatprep.subr.mxu0 0.0
        %286 = vmatpush1.msra.mxu0 0.0
        %287 = vmatprep.subr.mxu0 0.0
        %288 = vmatpush1.msra.mxu0 0.0
        %289 = vmatprep.subr.mxu0 0.0
        %290 = vmatpush1.msra.mxu0 0.0
        %291 = vmatprep.subr.mxu0 0.0
        %292 = vmatpush1.msra.mxu0 0.0
        %293 = vmatprep.subr.mxu0 0.0
        %294 = vmatpush1.msra.mxu0 0.0
        %295 = vmatprep.subr.mxu0 0.0
        %296 = vmatpush1.msra.mxu0 0.0
        %297 = vmatprep.subr.mxu0 0.0
        %298 = vmatpush1.msra.mxu0 0.0
        %299 = vmatprep.subr.mxu0 0.0
        %300 = vmatpush1.msra.mxu0 0.0
        %301 = vmatprep.subr.mxu0 0.0
        %302 = vmatpush1.msra.mxu0 0.0
        %303 = vmatprep.subr.mxu0 0.0
        %304 = vmatpush1.msra.mxu0 0.0
        %305 = vmatprep.mubr.f32.mxu0 0.0
        %306 = vmatmul.mubr.f32.gmra.mrb[0].mxu0 %v236
        %v307 = vpop.f32.mrb[0].mxu0
        %v308 = vadd.f32 0.0, %v307
        %v309 = vpop.f32.mrb[0].mxu0
        %310 = vmatprep.mubr.f32.mxu0 0.0
        %311 = vmatmul.mubr.f32.gmra.mrb[0].mxu0 %v239
        %v312 = vpop.f32.mrb[0].mxu0
        %v313 = vadd.f32 0.0, %v312
        %v314 = vpop.f32.mrb[0].mxu0
        %315 = vdwg.mxu0
        %v316 = vadd.f32 %v225, %v308
        %v317 = vadd.f32 %v225, %v313
        %s318 = sadd.s32 %s219, 1
        %s319 = scalar_lea.vmem %s191, %s318 [#allocation2]
        %v320 = vld [vmem:[%s319] sm:$0xff]
        %v321 = vld [vmem:[%s319 + $0x8] sm:$0xff]
        %s322 = scalar_lea.vmem [#allocation5], 32
        %v323 = vld [vmem:[%s322] sm:$0xff]
        %v324 = vld [vmem:[%s322 + $0x8] sm:$0xff]
        %v325 = vld [vmem:[%s322 + $0x10] sm:$0xff]
        %v326 = vld [vmem:[%s322 + $0x18] sm:$0xff]
        %v328 = vsel %vm234, %v320, 0
        %v331 = vsel %vm234, %v321, 0
        %333 = vmatprep.subr.mxu0 0.0
        %334 = vmatpush1.msra.mxu0 %v323
        %335 = vmatprep.subr.mxu0 0.0
        %336 = vmatpush1.msra.mxu0 %v324
        %337 = vmatprep.subr.mxu0 0.0
        %338 = vmatpush1.msra.mxu0 %v325
        %339 = vmatprep.subr.mxu0 0.0
        %340 = vmatpush1.msra.mxu0 %v326
        %341 = vmatprep.subr.mxu0 0.0
        %342 = vmatpush1.msra.mxu0 0.0
        %343 = vmatprep.subr.mxu0 0.0
        %344 = vmatpush1.msra.mxu0 0.0
        %345 = vmatprep.subr.mxu0 0.0
        %346 = vmatpush1.msra.mxu0 0.0
        %347 = vmatprep.subr.mxu0 0.0
        %348 = vmatpush1.msra.mxu0 0.0
        %349 = vmatprep.subr.mxu0 0.0
        %350 = vmatpush1.msra.mxu0 0.0
        %351 = vmatprep.subr.mxu0 0.0
        %352 = vmatpush1.msra.mxu0 0.0
        %353 = vmatprep.subr.mxu0 0.0
        %354 = vmatpush1.msra.mxu0 0.0
        %355 = vmatprep.subr.mxu0 0.0
        %356 = vmatpush1.msra.mxu0 0.0
        %357 = vmatprep.subr.mxu0 0.0
        %358 = vmatpush1.msra.mxu0 0.0
        %359 = vmatprep.subr.mxu0 0.0
        %360 = vmatpush1.msra.mxu0 0.0
        %361 = vmatprep.subr.mxu0 0.0
        %362 = vmatpush1.msra.mxu0 0.0
        %363 = vmatprep.subr.mxu0 0.0
        %364 = vmatpush1.msra.mxu0 0.0
        %365 = vmatprep.subr.mxu0 0.0
        %366 = vmatpush1.msra.mxu0 0.0
        %367 = vmatprep.subr.mxu0 0.0
        %368 = vmatpush1.msra.mxu0 0.0
        %369 = vmatprep.subr.mxu0 0.0
        %370 = vmatpush1.msra.mxu0 0.0
        %371 = vmatprep.subr.mxu0 0.0
        %372 = vmatpush1.msra.mxu0 0.0
        %373 = vmatprep.subr.mxu0 0.0
        %374 = vmatpush1.msra.mxu0 0.0
        %375 = vmatprep.subr.mxu0 0.0
        %376 = vmatpush1.msra.mxu0 0.0
        %377 = vmatprep.subr.mxu0 0.0
        %378 = vmatpush1.msra.mxu0 0.0
        %379 = vmatprep.subr.mxu0 0.0
        %380 = vmatpush1.msra.mxu0 0.0
        %381 = vmatprep.subr.mxu0 0.0
        %382 = vmatpush1.msra.mxu0 0.0
        %383 = vmatprep.subr.mxu0 0.0
        %384 = vmatpush1.msra.mxu0 0.0
        %385 = vmatprep.subr.mxu0 0.0
        %386 = vmatpush1.msra.mxu0 0.0
        %387 = vmatprep.subr.mxu0 0.0
        %388 = vmatpush1.msra.mxu0 0.0
        %389 = vmatprep.subr.mxu0 0.0
        %390 = vmatpush1.msra.mxu0 0.0
        %391 = vmatprep.subr.mxu0 0.0
        %392 = vmatpush1.msra.mxu0 0.0
        %393 = vmatprep.subr.mxu0 0.0
        %394 = vmatpush1.msra.mxu0 0.0
        %395 = vmatprep.subr.mxu0 0.0
        %396 = vmatpush1.msra.mxu0 0.0
        %397 = vmatprep.mubr.f32.mxu0 0.0
        %398 = vmatmul.mubr.f32.gmra.mrb[0].mxu0 %v328
        %v399 = vpop.f32.mrb[0].mxu0
        %v400 = vadd.f32 0.0, %v399
        %v401 = vpop.f32.mrb[0].mxu0
        %402 = vmatprep.mubr.f32.mxu0 0.0
        %403 = vmatmul.mubr.f32.gmra.mrb[0].mxu0 %v331
        %v404 = vpop.f32.mrb[0].mxu0
        %v405 = vadd.f32 0.0, %v404
        %v406 = vpop.f32.mrb[0].mxu0
        %407 = vdwg.mxu0
        %v408 = vadd.f32 %v316, %v400
        %v409 = vadd.f32 %v317, %v405
        %s410 = sadd.s32 %s219, 2
        %s411 = scalar_lea.vmem %s191, %s410 [#allocation2]
        %v412 = vld [vmem:[%s411] sm:$0xff]
        %v413 = vld [vmem:[%s411 + $0x8] sm:$0xff]
        %s414 = scalar_lea.vmem [#allocation5], 64
        %v415 = vld [vmem:[%s414] sm:$0xff]
        %v416 = vld [vmem:[%s414 + $0x8] sm:$0xff]
        %v417 = vld [vmem:[%s414 + $0x10] sm:$0xff]
        %v418 = vld [vmem:[%s414 + $0x18] sm:$0xff]
        %v420 = vsel %vm234, %v412, 0
        %v423 = vsel %vm234, %v413, 0
        %425 = vmatprep.subr.mxu0 0.0
        %426 = vmatpush1.msra.mxu0 %v415
        %427 = vmatprep.subr.mxu0 0.0
        %428 = vmatpush1.msra.mxu0 %v416
        %429 = vmatprep.subr.mxu0 0.0
        %430 = vmatpush1.msra.mxu0 %v417
        %431 = vmatprep.subr.mxu0 0.0
        %432 = vmatpush1.msra.mxu0 %v418
        %433 = vmatprep.subr.mxu0 0.0
        %434 = vmatpush1.msra.mxu0 0.0
        %435 = vmatprep.subr.mxu0 0.0
        %436 = vmatpush1.msra.mxu0 0.0
        %437 = vmatprep.subr.mxu0 0.0
        %438 = vmatpush1.msra.mxu0 0.0
        %439 = vmatprep.subr.mxu0 0.0
        %440 = vmatpush1.msra.mxu0 0.0
        %441 = vmatprep.subr.mxu0 0.0
        %442 = vmatpush1.msra.mxu0 0.0
        %443 = vmatprep.subr.mxu0 0.0
        %444 = vmatpush1.msra.mxu0 0.0
        %445 = vmatprep.subr.mxu0 0.0
        %446 = vmatpush1.msra.mxu0 0.0
        %447 = vmatprep.subr.mxu0 0.0
        %448 = vmatpush1.msra.mxu0 0.0
        %449 = vmatprep.subr.mxu0 0.0
        %450 = vmatpush1.msra.mxu0 0.0
        %451 = vmatprep.subr.mxu0 0.0
        %452 = vmatpush1.msra.mxu0 0.0
        %453 = vmatprep.subr.mxu0 0.0
        %454 = vmatpush1.msra.mxu0 0.0
        %455 = vmatprep.subr.mxu0 0.0
        %456 = vmatpush1.msra.mxu0 0.0
        %457 = vmatprep.subr.mxu0 0.0
        %458 = vmatpush1.msra.mxu0 0.0
        %459 = vmatprep.subr.mxu0 0.0
        %460 = vmatpush1.msra.mxu0 0.0
        %461 = vmatprep.subr.mxu0 0.0
        %462 = vmatpush1.msra.mxu0 0.0
        %463 = vmatprep.subr.mxu0 0.0
        %464 = vmatpush1.msra.mxu0 0.0
        %465 = vmatprep.subr.mxu0 0.0
        %466 = vmatpush1.msra.mxu0 0.0
        %467 = vmatprep.subr.mxu0 0.0
        %468 = vmatpush1.msra.mxu0 0.0
        %469 = vmatprep.subr.mxu0 0.0
        %470 = vmatpush1.msra.mxu0 0.0
        %471 = vmatprep.subr.mxu0 0.0
        %472 = vmatpush1.msra.mxu0 0.0
        %473 = vmatprep.subr.mxu0 0.0
        %474 = vmatpush1.msra.mxu0 0.0
        %475 = vmatprep.subr.mxu0 0.0
        %476 = vmatpush1.msra.mxu0 0.0
        %477 = vmatprep.subr.mxu0 0.0
        %478 = vmatpush1.msra.mxu0 0.0
        %479 = vmatprep.subr.mxu0 0.0
        %480 = vmatpush1.msra.mxu0 0.0
        %481 = vmatprep.subr.mxu0 0.0
        %482 = vmatpush1.msra.mxu0 0.0
        %483 = vmatprep.subr.mxu0 0.0
        %484 = vmatpush1.msra.mxu0 0.0
        %485 = vmatprep.subr.mxu0 0.0
        %486 = vmatpush1.msra.mxu0 0.0
        %487 = vmatprep.subr.mxu0 0.0
        %488 = vmatpush1.msra.mxu0 0.0
        %489 = vmatprep.mubr.f32.mxu0 0.0
        %490 = vmatmul.mubr.f32.gmra.mrb[0].mxu0 %v420
        %v491 = vpop.f32.mrb[0].mxu0
        %v492 = vadd.f32 0.0, %v491
        %v493 = vpop.f32.mrb[0].mxu0
        %494 = vmatprep.mubr.f32.mxu0 0.0
        %495 = vmatmul.mubr.f32.gmra.mrb[0].mxu0 %v423
        %v496 = vpop.f32.mrb[0].mxu0
        %v497 = vadd.f32 0.0, %v496
        %v498 = vpop.f32.mrb[0].mxu0
        %499 = vdwg.mxu0
        %v500 = vadd.f32 %v408, %v492
        %v501 = vadd.f32 %v409, %v497
        %502 = vst [vmem:[%s217] sm:$0xff] %v500
        %503 = vst [vmem:[%s217 + $0x8] sm:$0xff] %v501
        %s504 = sand.u32 %s111, 1
        %s505 = scalar_lea.sflag [#allocation4], %s504
        %s506 = sand.u32 %s111, 1
        %s507 = smul.addr %s506, 16
        %s508 = scalar_lea.vmem [#allocation7], %s507
        // Predicated region
        $region41: #{tpu_custom_call.1} parent=31 // pred_check
          %p509 = pneg %p121
        $region42: #{tpu_custom_call.1} parent=31 // pred_check_branch
          %511 = sbr.rel (%p509) target = $region44
        $region43: #{tpu_custom_call.1} parent=31 // pred_region
          %s512 = smul.u32 2, %s26
          %s514 = ssub.s32 256, 256
          %515 = vsyncadd %s505, %s514
          %s516 = smul.addr %s25, 2
          %s517 = sadd.s32 %s512, %s516
          %s518 = smul.addr %s517, 128
          %s519 = scalar_lea.hbm %s3, %s518
          %s520 = sshll.u32 %s508, 4
          %s521 = int_to_ptr.vmem [resolvable:$true] %s520
          %526 = dma.vmem_to_hbm [thread:$0]  %s521, 256, %s519, %s505, 128, 128, 8
        $region44: #{tpu_custom_call.1} parent=31 // pred_fallthru
          _
      $region32: #{tpu_custom_call.1} parent=5 // pred_fallthru
        _
      %p527 = scmp.le.s32.totalorder 2, %s16
      // Predicated region
      $region45: #{tpu_custom_call.1} parent=5 // pred_check
        %p528 = pneg %p527
      $region46: #{tpu_custom_call.1} parent=5 // pred_check_branch
        %530 = sbr.rel (%p528) target = $region48
      $region47: #{tpu_custom_call.1} parent=5 // pred_region
        %s531 = ssub.s32 %s16, 2
        // Predicated region
        $region49: #{tpu_custom_call.1} parent=47 // pred_check
          %p532 = pneg %p127
        $region50: #{tpu_custom_call.1} parent=47 // pred_check_branch
          %534 = sbr.rel (%p532) target = $region52
        $region51: #{tpu_custom_call.1} parent=47 // pred_region
          %s535 = sand.u32 %s112, 1
          %s536 = scalar_lea.sflag [#allocation4], %s535
          %s537 = sand.u32 %s112, 1
          %s538 = smul.addr %s537, 16
          %s539 = scalar_lea.vmem [#allocation7], %s538
          %540 = dma.done %s536, 256
        $region52: #{tpu_custom_call.1} parent=47 // pred_fallthru
          _
      $region48: #{tpu_custom_call.1} parent=5 // pred_fallthru
        _
    $region6: #{tpu_custom_call.1} parent=1 // loop_footer
      %s20 = sadd.s32 1, %s16
    $region7: #{tpu_custom_call.1} parent=1 // loop_footer_branch
      %15 = sbr.rel target = $region3
    $region8: #{tpu_custom_call.1} parent=1 // loop_exit
      _
    %541 = vsyncpa [#allocation3], 1
    %s542 = scalar_lea.sflag [#allocation3], 1
    %543 = vsyncpa %s542, 1
    %544 = vsyncpa [#allocation6], 1
    %545 = vsyncpa [#allocation4], 1
    %s546 = scalar_lea.sflag [#allocation4], 1
    %547 = vsyncpa %s546, 1

</llo_original>
